<compile_context>
chip_gen: v6e
topology: v6e:2x2x1
jax: 0.10.0
libtpu: 0.0.40
codegen_flags: <defaults>
</compile_context>

<pallas_src>
import functools

import jax
import jax.numpy as jnp
from jax.experimental import pallas as pl
from jax.experimental.pallas import tpu as pltpu


def _decoder_fc_kernel(x_ref, w1_ref, b1_ref, w2_ref, b2_ref, w3_ref, b3_ref,
                       out_ref):
    # Hidden MLP (tiny).  Recomputed every grid step on resident weight blocks.
    h = jnp.dot(x_ref[...], w1_ref[...],
                preferred_element_type=jnp.float32) + b1_ref[...]
    h = jnp.where(h >= 0, h, 0.01 * h)                      # LeakyReLU(0.01)
    h = jnp.dot(h, w2_ref[...],
                preferred_element_type=jnp.float32) + b2_ref[...]
    h = jnp.where(h >= 0, h, 0.01 * h)                      # LeakyReLU(0.01)

    # Output projection on the current lane-dense column tile of W3.
    y = jnp.dot(h, w3_ref[...],
                preferred_element_type=jnp.float32) + b3_ref[...]
    out_ref[...] = jax.nn.sigmoid(y).astype(out_ref.dtype)  # Sigmoid


def decoder_fc_forward(x, params, output_pts, *, tile_n=1024):
    """DecoderFC forward.  x: (bz, latent_dim) -> (bz, 3, output_pts)."""
    w1, b1, w2, b2, w3, b3 = params
    bz, latent_dim = x.shape
    h1 = w1.shape[1]
    h2 = w2.shape[1]
    n3 = w3.shape[1]
    assert n3 == 3 * output_pts

    # Lane-dense tile of the wide output dim (multiple of 128, or the full dim).
    if tile_n >= n3:
        tile_n = n3
    else:
        tile_n = max(128, (tile_n // 128) * 128)
    grid_n = pl.cdiv(n3, tile_n)

    full = lambda shape: pl.BlockSpec(shape, lambda j: (0, 0))

    out = pl.pallas_call(
        _decoder_fc_kernel,
        out_shape=jax.ShapeDtypeStruct((bz, n3), jnp.float32),
        grid_spec=pltpu.PrefetchScalarGridSpec(
            num_scalar_prefetch=0,
            grid=(grid_n,),
            in_specs=[
                full((bz, latent_dim)),                         # x (resident)
                full((latent_dim, h1)), full((1, h1)),          # layer 1
                full((h1, h2)), full((1, h2)),                  # layer 2
                pl.BlockSpec((h2, tile_n), lambda j: (0, j)),   # W3 col tile
                pl.BlockSpec((1, tile_n), lambda j: (0, j)),    # b3 col tile
            ],
            out_specs=pl.BlockSpec((bz, tile_n), lambda j: (0, j)),
        ),
        compiler_params=pltpu.CompilerParams(
            dimension_semantics=("parallel",)),
    )(x, w1, b1, w2, b2, w3, b3)

    # PyTorch: x.view((-1, 3, output_pts)) — contiguous, zero-copy reshape.
    return out.reshape(bz, 3, output_pts)


def init_params(key, latent_dim, n_features, output_pts):
    """Deterministic init matching nn.Linear shapes.

    PyTorch Linear weight (out, in) is stored transposed here as (in, out);
    bias is stored as (1, out)."""
    dims = [latent_dim] + list(n_features) + [output_pts * 3]
    params = []
    for i in range(len(dims) - 1):
        key, wk, bk = jax.random.split(key, 3)
        bound = float(dims[i]) ** -0.5
        w = jax.random.uniform(wk, (dims[i], dims[i + 1]), jnp.float32,
                               minval=-bound, maxval=bound)
        b = jax.random.uniform(bk, (1, dims[i + 1]), jnp.float32,
                               minval=-bound, maxval=bound)
        params += [w, b]
    return key, tuple(params)


def _reference(x, params, output_pts):
    w1, b1, w2, b2, w3, b3 = params
    h = x @ w1 + b1
    h = jnp.where(h >= 0, h, 0.01 * h)
    h = h @ w2 + b2
    h = jnp.where(h >= 0, h, 0.01 * h)
    y = jax.nn.sigmoid(h @ w3 + b3)
    return y.reshape(x.shape[0], 3, output_pts)


if __name__ == "__main__":
    # Small shapes consistent with the module defaults (scaled down).
    bz = 2
    latent_dim = 32
    n_features = (32, 32)
    output_pts = 128          # final layer width = 3 * 128 = 384

    key = jax.random.PRNGKey(0)
    key, params = init_params(key, latent_dim, n_features, output_pts)
    key, xk = jax.random.split(key)
    x = jax.random.normal(xk, (bz, latent_dim), jnp.float32)

    # tile_n=128 so the small test actually exercises a multi-step grid.
    fwd = jax.jit(functools.partial(decoder_fc_forward,
                                    output_pts=output_pts, tile_n=128))
    out = fwd(x, params)
    jax.block_until_ready(out)

    assert out.shape == (bz, 3, output_pts), out.shape
    ref = _reference(x, params, output_pts)
    assert bool(jnp.allclose(out, ref, atol=1e-5, rtol=1e-5))
    assert bool(jnp.all((out >= 0.0) & (out <= 1.0)))  # sigmoid range sanity
    print("KERNEL_OK")
</pallas_src>

<mosaic_0001>
module attributes {stable_mosaic.version = 11 : i64} {
  func.func @_decoder_fc_kernel(%arg0: i32, %arg1: memref<2x32xf32, #tpu.memory_space<vmem>>, %arg2: memref<32x32xf32, #tpu.memory_space<vmem>>, %arg3: memref<1x32xf32, #tpu.memory_space<vmem>>, %arg4: memref<32x32xf32, #tpu.memory_space<vmem>>, %arg5: memref<1x32xf32, #tpu.memory_space<vmem>>, %arg6: memref<32x128xf32, #tpu.memory_space<vmem>>, %arg7: memref<1x128xf32, #tpu.memory_space<vmem>>, %arg8: memref<2x128xf32, #tpu.memory_space<vmem>>) attributes {dimension_semantics = [#tpu.dimension_semantics<parallel>], iteration_bounds = array<i64: 3>, scalar_prefetch = 0 : i64, scratch_operands = 0 : i64, tpu.core_type = #tpu.core_type<tc>, window_params = [{pipeline_mode = #tpu.pipeline_mode<synchronous>, transform_indices = @transform_0, window_bounds = array<i64: 2, 32>}, {pipeline_mode = #tpu.pipeline_mode<synchronous>, transform_indices = @transform_1, window_bounds = array<i64: 32, 32>}, {pipeline_mode = #tpu.pipeline_mode<synchronous>, transform_indices = @transform_2, window_bounds = array<i64: 1, 32>}, {pipeline_mode = #tpu.pipeline_mode<synchronous>, transform_indices = @transform_3, window_bounds = array<i64: 32, 32>}, {pipeline_mode = #tpu.pipeline_mode<synchronous>, transform_indices = @transform_4, window_bounds = array<i64: 1, 32>}, {transform_indices = @transform_5, window_bounds = array<i64: 32, 128>}, {transform_indices = @transform_6, window_bounds = array<i64: 1, 128>}, {transform_indices = @transform_7, window_bounds = array<i64: 2, 128>}]} {
    %c0 = arith.constant 0 : index
    %c0_0 = arith.constant 0 : index
    %0 = vector.load %arg1[%c0, %c0_0] : memref<2x32xf32, #tpu.memory_space<vmem>>, vector<2x32xf32>
    %c0_1 = arith.constant 0 : index
    %c0_2 = arith.constant 0 : index
    %1 = vector.load %arg2[%c0_1, %c0_2] : memref<32x32xf32, #tpu.memory_space<vmem>>, vector<32x32xf32>
    %cst = arith.constant dense<0.000000e+00> : vector<2x32xf32>
    %2 = tpu.matmul %0, %1, %cst {dimension_numbers = #tpu.dot_dimension_numbers<[1], [0], [0], [1], [0, 0, 1, 1], [], []>} : vector<2x32xf32>, vector<32x32xf32>, vector<2x32xf32> -> vector<2x32xf32>
    %c0_3 = arith.constant 0 : index
    %c0_4 = arith.constant 0 : index
    %3 = vector.load %arg3[%c0_3, %c0_4] : memref<1x32xf32, #tpu.memory_space<vmem>>, vector<1x32xf32>
    %4 = vector.broadcast %3 : vector<1x32xf32> to vector<2x32xf32>
    %5 = arith.addf %2, %4 : vector<2x32xf32>
    %cst_5 = arith.constant 0.000000e+00 : f32
    %6 = vector.broadcast %cst_5 : f32 to vector<2x32xf32>
    %7 = arith.cmpf oge, %5, %6 : vector<2x32xf32>
    %cst_6 = arith.constant 0.00999999977 : f32
    %8 = vector.broadcast %cst_6 : f32 to vector<2x32xf32>
    %9 = arith.mulf %8, %5 : vector<2x32xf32>
    %10 = arith.select %7, %5, %9 : vector<2x32xi1>, vector<2x32xf32>
    %c0_7 = arith.constant 0 : index
    %c0_8 = arith.constant 0 : index
    %11 = vector.load %arg4[%c0_7, %c0_8] : memref<32x32xf32, #tpu.memory_space<vmem>>, vector<32x32xf32>
    %cst_9 = arith.constant dense<0.000000e+00> : vector<2x32xf32>
    %12 = tpu.matmul %10, %11, %cst_9 {dimension_numbers = #tpu.dot_dimension_numbers<[1], [0], [0], [1], [0, 0, 1, 1], [], []>} : vector<2x32xf32>, vector<32x32xf32>, vector<2x32xf32> -> vector<2x32xf32>
    %c0_10 = arith.constant 0 : index
    %c0_11 = arith.constant 0 : index
    %13 = vector.load %arg5[%c0_10, %c0_11] : memref<1x32xf32, #tpu.memory_space<vmem>>, vector<1x32xf32>
    %14 = vector.broadcast %13 : vector<1x32xf32> to vector<2x32xf32>
    %15 = arith.addf %12, %14 : vector<2x32xf32>
    %cst_12 = arith.constant 0.000000e+00 : f32
    %16 = vector.broadcast %cst_12 : f32 to vector<2x32xf32>
    %17 = arith.cmpf oge, %15, %16 : vector<2x32xf32>
    %cst_13 = arith.constant 0.00999999977 : f32
    %18 = vector.broadcast %cst_13 : f32 to vector<2x32xf32>
    %19 = arith.mulf %18, %15 : vector<2x32xf32>
    %20 = arith.select %17, %15, %19 : vector<2x32xi1>, vector<2x32xf32>
    %c0_14 = arith.constant 0 : index
    %c0_15 = arith.constant 0 : index
    %21 = vector.load %arg6[%c0_14, %c0_15] : memref<32x128xf32, #tpu.memory_space<vmem>>, vector<32x128xf32>
    %cst_16 = arith.constant dense<0.000000e+00> : vector<2x128xf32>
    %22 = tpu.matmul %20, %21, %cst_16 {dimension_numbers = #tpu.dot_dimension_numbers<[1], [0], [0], [1], [0, 0, 1, 1], [], []>} : vector<2x32xf32>, vector<32x128xf32>, vector<2x128xf32> -> vector<2x128xf32>
    %c0_17 = arith.constant 0 : index
    %c0_18 = arith.constant 0 : index
    %23 = vector.load %arg7[%c0_17, %c0_18] : memref<1x128xf32, #tpu.memory_space<vmem>>, vector<1x128xf32>
    %24 = vector.broadcast %23 : vector<1x128xf32> to vector<2x128xf32>
    %25 = arith.addf %22, %24 : vector<2x128xf32>
    %26 = arith.negf %25 : vector<2x128xf32>
    %27 = math.exp %26 : vector<2x128xf32>
    %cst_19 = arith.constant 1.000000e+00 : f32
    %28 = vector.broadcast %cst_19 : f32 to vector<2x128xf32>
    %29 = arith.addf %28, %27 : vector<2x128xf32>
    %30 = arith.divf %28, %29 : vector<2x128xf32>
    %c0_20 = arith.constant 0 : index
    %c0_21 = arith.constant 0 : index
    %31 = vector.load %arg8[%c0_20, %c0_21] : memref<2x128xf32, #tpu.memory_space<vmem>>, vector<2x128xf32>
    tpu.vector_store %arg8[%c0_20, %c0_21], %30 {strides = array<i32>} : memref<2x128xf32, #tpu.memory_space<vmem>>, vector<2x128xf32>,
    return
  }
  func.func @transform_0(%arg0: i32) -> (i32, i32) {
    %c0_i32 = arith.constant 0 : i32
    %c0_i32_0 = arith.constant 0 : i32
    %c0_i32_1 = arith.constant 0 : i32
    return %c0_i32, %c0_i32_0 : i32, i32
  }
  func.func @transform_1(%arg0: i32) -> (i32, i32) {
    %c0_i32 = arith.constant 0 : i32
    %c0_i32_0 = arith.constant 0 : i32
    %c0_i32_1 = arith.constant 0 : i32
    return %c0_i32, %c0_i32_0 : i32, i32
  }
  func.func @transform_2(%arg0: i32) -> (i32, i32) {
    %c0_i32 = arith.constant 0 : i32
    %c0_i32_0 = arith.constant 0 : i32
    %c0_i32_1 = arith.constant 0 : i32
    return %c0_i32, %c0_i32_0 : i32, i32
  }
  func.func @transform_3(%arg0: i32) -> (i32, i32) {
    %c0_i32 = arith.constant 0 : i32
    %c0_i32_0 = arith.constant 0 : i32
    %c0_i32_1 = arith.constant 0 : i32
    return %c0_i32, %c0_i32_0 : i32, i32
  }
  func.func @transform_4(%arg0: i32) -> (i32, i32) {
    %c0_i32 = arith.constant 0 : i32
    %c0_i32_0 = arith.constant 0 : i32
    %c0_i32_1 = arith.constant 0 : i32
    return %c0_i32, %c0_i32_0 : i32, i32
  }
  func.func @transform_5(%arg0: i32) -> (i32, i32) {
    %c0_i32 = arith.constant 0 : i32
    %c0_i32_0 = arith.constant 0 : i32
    return %c0_i32, %arg0 : i32, i32
  }
  func.func @transform_6(%arg0: i32) -> (i32, i32) {
    %c0_i32 = arith.constant 0 : i32
    %c0_i32_0 = arith.constant 0 : i32
    return %c0_i32, %arg0 : i32, i32
  }
  func.func @transform_7(%arg0: i32) -> (i32, i32) {
    %c0_i32 = arith.constant 0 : i32
    %c0_i32_0 = arith.constant 0 : i32
    return %c0_i32, %arg0 : i32, i32
  }
}

</mosaic_0001>

<llo_original>
// kernel: decoder_fc_forward.1
$region0: #{decoder_fc_forward.1}
  #allocation0 [shape = 'u32[]', space=smem, size = 0x4, offset = 0x4, fixed_abs, tag = 'smem constant byte address 0x4 - core index']
  #allocation1 [shape = 'u32[144,128]{1,0:T(1,128)}', space=vmem, size = 0x12000, scoped, tag = 'internal scratch']
  %s0 = inlined_call_operand.hbm [shape: f32[2,32], index: 0, kind: input, shape index: {}]
  %s1 = inlined_call_operand.hbm [shape: f32[32,32], index: 1, kind: input, shape index: {}]
  %s2 = inlined_call_operand.vmem [shape: f32[1,32], index: 2, kind: input, shape index: {}]
  %s3 = inlined_call_operand.hbm [shape: f32[32,32], index: 3, kind: input, shape index: {}]
  %s4 = inlined_call_operand.vmem [shape: f32[1,32], index: 4, kind: input, shape index: {}]
  %s5 = inlined_call_operand.hbm [shape: f32[32,384], index: 5, kind: input, shape index: {}]
  %s6 = inlined_call_operand.vmem [shape: f32[1,384], index: 6, kind: input, shape index: {}]
  %s7 = inlined_call_operand.hbm [shape: f32[2,384], index: 7, kind: output, shape index: {}]
  %s8 = sld [smem:[#allocation0]]
  $region77: #{decoder_fc_forward.1} parent=0
    _
  %s10 = ssub.s32 1, %s8
  %s11 = scalar_select 0, %s10, %s8
  $region1: #{decoder_fc_forward.1} parent=0
    #allocation2 [shape = 'u8[1024]{0}', space=vmem, size = 0x400, scoped, tag = 'input window, operand 0, single buffered']
    #allocation3 [shape = 's32[2]{0}', space=sflag, size = 0x8, scoped, tag = 'scoped memory for decoder_fc_forward.1']
    #allocation4 [shape = 's32[2]{0}', space=sflag, size = 0x8, scoped, tag = 'scoped memory for decoder_fc_forward.1']
    #allocation5 [shape = 'u8[16384]{0}', space=vmem, size = 0x4000, scoped, tag = 'input window, operand 1, single buffered']
    #allocation6 [shape = 's32[1]{0}', space=sflag, size = 0x4, scoped, tag = 'scoped memory for decoder_fc_forward.1']
    #allocation7 [shape = 'u8[16384]{0}', space=vmem, size = 0x4000, scoped, tag = 'input window, operand 3, single buffered']
    #allocation8 [shape = 'u8[32768]{0}', space=vmem, size = 0x8000, scoped, tag = 'input window, operand 5']
    #allocation9 [shape = 's32[2]{0}', space=sflag, size = 0x8, scoped, tag = 'scoped memory for decoder_fc_forward.1']
    #allocation10 [shape = 'u8[2048]{0}', space=vmem, size = 0x800, scoped, tag = 'output window, operand 0']
    %12 = vsyncpa [#allocation3], 0
    %13 = vsyncpa [#allocation6], 0
    %14 = vsyncpa [#allocation9], 0
    %s15 = scalar_lea.sflag [#allocation9], 1
    %16 = vsyncpa %s15, 0
    %17 = vsyncpa [#allocation4], 0
    %s18 = scalar_lea.sflag [#allocation4], 1
    %19 = vsyncpa %s18, 0
    loop: start=0, step=1, limit=5
    $region2: #{decoder_fc_forward.1} parent=1 // loop_pre_header
      _
    $region3: #{decoder_fc_forward.1} parent=1 // loop_header
      %s21 = sphi 0, %s25
      %p22 = scmp.ge.s32.totalorder %s21, 5
      %s29 = sphi 0, %s29
      %s31 = sphi 0, %s29
      %s32 = sphi 0, %s31
      %s46 = sphi 0, %s32
      %s50 = sphi 0, %s50
      %s52 = sphi 0, %s50
      %s53 = sphi 0, %s52
      %s67 = sphi 0, %s53
      %s71 = sphi 0, %s71
      %s73 = sphi 0, %s71
      %s74 = sphi 0, %s73
      %s88 = sphi 0, %s74
      %s92 = sphi 0, %s92
      %s94 = sphi 0, %s92
      %s95 = sphi 0, %s94
      %s109 = sphi 0, %s95
      %s113 = sphi 0, %s113
      %s115 = sphi 0, %s113
      %s116 = sphi 0, %s115
      %s130 = sphi 0, %s116
      %s136 = sphi 0, %s138
      %s139 = sphi 0, %s136
      %s140 = sphi 0, %s139
      %s156 = sphi 0, %s140
      %s162 = sphi 0, %s164
      %s165 = sphi 0, %s162
      %s166 = sphi 0, %s165
      %s182 = sphi 0, %s166
      %s188 = sphi 0, %s190
      %s191 = sphi 0, %s188
      %s192 = sphi 0, %s191
      %s208 = sphi 0, %s192
    $region4: #{decoder_fc_forward.1} parent=1 // loop_header_branch
      %24 = sbr.rel (%p22) target = $region8
    $region5: #{decoder_fc_forward.1} parent=1 // loop_body
      %s26 = ssub.s32 %s21, 1
      %s27 = ssub.s32 %s21, 2
      %s28 = sadd.s32 %s21, 1
      %s30 = sadd.s32 %s29, 1
      %p33 = scmp.eq.s32.totalorder %s21, 2
      %p34 = scmp.ne.s32.totalorder %s29, %s31
      %p35 = scmp.eq.s32.totalorder %s21, 0
      %p36 = por %p34, %p35
      %p37 = scmp.ne.s32.totalorder %s29, %s31
      %p38 = scmp.eq.s32.totalorder %s26, 2
      %p39 = por %p37, %p38
      %p40 = scmp.ne.s32.totalorder %s31, %s32
      %p41 = scmp.eq.s32.totalorder %s26, 0
      %p42 = por %p40, %p41
      %p43 = scmp.ne.s32.totalorder %s31, %s32
      %p44 = scmp.eq.s32.totalorder %s27, 2
      %p45 = por %p43, %p44
      %p47 = scmp.ne.s32.totalorder %s32, %s46
      %p48 = scmp.eq.s32.totalorder %s27, 0
      %p49 = por %p47, %p48
      %s51 = sadd.s32 %s50, 1
      %p54 = scmp.eq.s32.totalorder %s21, 2
      %p55 = scmp.ne.s32.totalorder %s50, %s52
      %p56 = scmp.eq.s32.totalorder %s21, 0
      %p57 = por %p55, %p56
      %p58 = scmp.ne.s32.totalorder %s50, %s52
      %p59 = scmp.eq.s32.totalorder %s26, 2
      %p60 = por %p58, %p59
      %p61 = scmp.ne.s32.totalorder %s52, %s53
      %p62 = scmp.eq.s32.totalorder %s26, 0
      %p63 = por %p61, %p62
      %p64 = scmp.ne.s32.totalorder %s52, %s53
      %p65 = scmp.eq.s32.totalorder %s27, 2
      %p66 = por %p64, %p65
      %p68 = scmp.ne.s32.totalorder %s53, %s67
      %p69 = scmp.eq.s32.totalorder %s27, 0
      %p70 = por %p68, %p69
      %s72 = sadd.s32 %s71, 1
      %p75 = scmp.eq.s32.totalorder %s21, 2
      %p76 = scmp.ne.s32.totalorder %s71, %s73
      %p77 = scmp.eq.s32.totalorder %s21, 0
      %p78 = por %p76, %p77
      %p79 = scmp.ne.s32.totalorder %s71, %s73
      %p80 = scmp.eq.s32.totalorder %s26, 2
      %p81 = por %p79, %p80
      %p82 = scmp.ne.s32.totalorder %s73, %s74
      %p83 = scmp.eq.s32.totalorder %s26, 0
      %p84 = por %p82, %p83
      %p85 = scmp.ne.s32.totalorder %s73, %s74
      %p86 = scmp.eq.s32.totalorder %s27, 2
      %p87 = por %p85, %p86
      %p89 = scmp.ne.s32.totalorder %s74, %s88
      %p90 = scmp.eq.s32.totalorder %s27, 0
      %p91 = por %p89, %p90
      %s93 = sadd.s32 %s92, 1
      %p96 = scmp.eq.s32.totalorder %s21, 2
      %p97 = scmp.ne.s32.totalorder %s92, %s94
      %p98 = scmp.eq.s32.totalorder %s21, 0
      %p99 = por %p97, %p98
      %p100 = scmp.ne.s32.totalorder %s92, %s94
      %p101 = scmp.eq.s32.totalorder %s26, 2
      %p102 = por %p100, %p101
      %p103 = scmp.ne.s32.totalorder %s94, %s95
      %p104 = scmp.eq.s32.totalorder %s26, 0
      %p105 = por %p103, %p104
      %p106 = scmp.ne.s32.totalorder %s94, %s95
      %p107 = scmp.eq.s32.totalorder %s27, 2
      %p108 = por %p106, %p107
      %p110 = scmp.ne.s32.totalorder %s95, %s109
      %p111 = scmp.eq.s32.totalorder %s27, 0
      %p112 = por %p110, %p111
      %s114 = sadd.s32 %s113, 1
      %p117 = scmp.eq.s32.totalorder %s21, 2
      %p118 = scmp.ne.s32.totalorder %s113, %s115
      %p119 = scmp.eq.s32.totalorder %s21, 0
      %p120 = por %p118, %p119
      %p121 = scmp.ne.s32.totalorder %s113, %s115
      %p122 = scmp.eq.s32.totalorder %s26, 2
      %p123 = por %p121, %p122
      %p124 = scmp.ne.s32.totalorder %s115, %s116
      %p125 = scmp.eq.s32.totalorder %s26, 0
      %p126 = por %p124, %p125
      %p127 = scmp.ne.s32.totalorder %s115, %s116
      %p128 = scmp.eq.s32.totalorder %s27, 2
      %p129 = por %p127, %p128
      %p131 = scmp.ne.s32.totalorder %s116, %s130
      %p132 = scmp.eq.s32.totalorder %s27, 0
      %p133 = por %p131, %p132
      %s134 = ssub.s32 %s21, %s28
      %p135 = scmp.eq.s32.totalorder %s134, 0
      %s137 = sadd.s32 %s136, 1
      %s138 = scalar_select %p135, %s136, %s137
      %p141 = pneg %p135
      %p142 = scmp.eq.s32.totalorder %s21, 2
      %p143 = por %p141, %p142
      %p144 = scmp.ne.s32.totalorder %s136, %s139
      %p145 = scmp.eq.s32.totalorder %s21, 0
      %p146 = por %p144, %p145
      %p147 = scmp.ne.s32.totalorder %s136, %s139
      %p148 = scmp.eq.s32.totalorder %s26, 2
      %p149 = por %p147, %p148
      %p150 = scmp.ne.s32.totalorder %s139, %s140
      %p151 = scmp.eq.s32.totalorder %s26, 0
      %p152 = por %p150, %p151
      %p153 = scmp.ne.s32.totalorder %s139, %s140
      %p154 = scmp.eq.s32.totalorder %s27, 2
      %p155 = por %p153, %p154
      %p157 = scmp.ne.s32.totalorder %s140, %s156
      %p158 = scmp.eq.s32.totalorder %s27, 0
      %p159 = por %p157, %p158
      %s160 = ssub.s32 %s21, %s28
      %p161 = scmp.eq.s32.totalorder %s160, 0
      %s163 = sadd.s32 %s162, 1
      %s164 = scalar_select %p161, %s162, %s163
      %p167 = pneg %p161
      %p168 = scmp.eq.s32.totalorder %s21, 2
      %p169 = por %p167, %p168
      %p170 = scmp.ne.s32.totalorder %s162, %s165
      %p171 = scmp.eq.s32.totalorder %s21, 0
      %p172 = por %p170, %p171
      %p173 = scmp.ne.s32.totalorder %s162, %s165
      %p174 = scmp.eq.s32.totalorder %s26, 2
      %p175 = por %p173, %p174
      %p176 = scmp.ne.s32.totalorder %s165, %s166
      %p177 = scmp.eq.s32.totalorder %s26, 0
      %p178 = por %p176, %p177
      %p179 = scmp.ne.s32.totalorder %s165, %s166
      %p180 = scmp.eq.s32.totalorder %s27, 2
      %p181 = por %p179, %p180
      %p183 = scmp.ne.s32.totalorder %s166, %s182
      %p184 = scmp.eq.s32.totalorder %s27, 0
      %p185 = por %p183, %p184
      %s186 = ssub.s32 %s21, %s28
      %p187 = scmp.eq.s32.totalorder %s186, 0
      %s189 = sadd.s32 %s188, 1
      %s190 = scalar_select %p187, %s188, %s189
      %p193 = pneg %p187
      %p194 = scmp.eq.s32.totalorder %s21, 2
      %p195 = por %p193, %p194
      %p196 = scmp.ne.s32.totalorder %s188, %s191
      %p197 = scmp.eq.s32.totalorder %s21, 0
      %p198 = por %p196, %p197
      %p199 = scmp.ne.s32.totalorder %s188, %s191
      %p200 = scmp.eq.s32.totalorder %s26, 2
      %p201 = por %p199, %p200
      %p202 = scmp.ne.s32.totalorder %s191, %s192
      %p203 = scmp.eq.s32.totalorder %s26, 0
      %p204 = por %p202, %p203
      %p205 = scmp.ne.s32.totalorder %s191, %s192
      %p206 = scmp.eq.s32.totalorder %s27, 2
      %p207 = por %p205, %p206
      %p209 = scmp.ne.s32.totalorder %s192, %s208
      %p210 = scmp.eq.s32.totalorder %s27, 0
      %p211 = por %p209, %p210
      %p212 = scmp.le.s32.totalorder 1, %s21
      %p213 = scmp.lt.s32.totalorder %s21, 4
      %p214 = pnand %p212, %p213
      %p215 = pneg %p214
      // Predicated region
      $region9: #{decoder_fc_forward.1} parent=5 // pred_check
        _
      $region10: #{decoder_fc_forward.1} parent=5 // pred_check_branch
        %217 = sbr.rel (%p214) target = $region12
      $region11: #{decoder_fc_forward.1} parent=5 // pred_region
        %s218 = ssub.s32 %s21, 1
        // Predicated region
        $region13: #{decoder_fc_forward.1} parent=11 // pred_check
          %p219 = pneg %p42
        $region14: #{decoder_fc_forward.1} parent=11 // pred_check_branch
          %221 = sbr.rel (%p219) target = $region16
        $region15: #{decoder_fc_forward.1} parent=11 // pred_region
          %s223 = ssub.s32 32, 32
          %224 = vsyncadd [#allocation3], %s223
          %s226 = sshll.u32 [#allocation2], 4
          %s227 = int_to_ptr.vmem [resolvable:$true] %s226
          %229 = dma.hbm_to_vmem [thread:$0]  %s0, 32, %s227, [#allocation3]
        $region16: #{decoder_fc_forward.1} parent=11 // pred_fallthru
          _
        // Predicated region
        $region17: #{decoder_fc_forward.1} parent=11 // pred_check
          %p230 = pneg %p63
        $region18: #{decoder_fc_forward.1} parent=11 // pred_check_branch
          %232 = sbr.rel (%p230) target = $region20
        $region19: #{decoder_fc_forward.1} parent=11 // pred_region
          %s234 = ssub.s32 512, 512
          %235 = vsyncadd [#allocation6], %s234
          %s236 = sshll.u32 [#allocation5], 4
          %s237 = int_to_ptr.vmem [resolvable:$true] %s236
          %242 = dma.hbm_to_vmem [thread:$0]  %s1, 512, %s237, [#allocation6], 128, 128, 8
        $region20: #{decoder_fc_forward.1} parent=11 // pred_fallthru
          _
        // Predicated region
        $region21: #{decoder_fc_forward.1} parent=11 // pred_check
          %p243 = pneg %p84
        $region22: #{decoder_fc_forward.1} parent=11 // pred_check_branch
          %245 = sbr.rel (%p243) target = $region24
        $region23: #{decoder_fc_forward.1} parent=11 // pred_region
          _
        $region24: #{decoder_fc_forward.1} parent=11 // pred_fallthru
          _
        // Predicated region
        $region25: #{decoder_fc_forward.1} parent=11 // pred_check
          %p246 = pneg %p105
        $region26: #{decoder_fc_forward.1} parent=11 // pred_check_branch
          %248 = sbr.rel (%p246) target = $region28
        $region27: #{decoder_fc_forward.1} parent=11 // pred_region
          %s250 = ssub.s32 512, 512
          %251 = vsyncadd [#allocation6], %s250
          %s252 = sshll.u32 [#allocation7], 4
          %s253 = int_to_ptr.vmem [resolvable:$true] %s252
          %258 = dma.hbm_to_vmem [thread:$0]  %s3, 512, %s253, [#allocation6], 128, 128, 8
        $region28: #{decoder_fc_forward.1} parent=11 // pred_fallthru
          _
        // Predicated region
        $region29: #{decoder_fc_forward.1} parent=11 // pred_check
          %p259 = pneg %p126
        $region30: #{decoder_fc_forward.1} parent=11 // pred_check_branch
          %261 = sbr.rel (%p259) target = $region32
        $region31: #{decoder_fc_forward.1} parent=11 // pred_region
          _
        $region32: #{decoder_fc_forward.1} parent=11 // pred_fallthru
          _
      $region12: #{decoder_fc_forward.1} parent=5 // pred_fallthru
        _
      %p262 = scmp.lt.s32.totalorder %s21, 3
      // Predicated region
      $region33: #{decoder_fc_forward.1} parent=5 // pred_check
        %p263 = pneg %p262
      $region34: #{decoder_fc_forward.1} parent=5 // pred_check_branch
        %265 = sbr.rel (%p263) target = $region36
      $region35: #{decoder_fc_forward.1} parent=5 // pred_region
        // Predicated region
        $region37: #{decoder_fc_forward.1} parent=35 // pred_check
          %p266 = pneg %p146
        $region38: #{decoder_fc_forward.1} parent=35 // pred_check_branch
          %268 = sbr.rel (%p266) target = $region40
        $region39: #{decoder_fc_forward.1} parent=35 // pred_region
          %s269 = sand.u32 %s136, 1
          %s270 = scalar_lea.sflag [#allocation9], %s269
          %s271 = sand.u32 %s136, 1
          %s272 = smul.addr %s271, 32
          %s273 = scalar_lea.vmem [#allocation8], %s272
          %s275 = ssub.s32 512, 512
          %276 = vsyncadd %s270, %s275
          %s277 = smul.addr %s21, 128
          %s278 = scalar_lea.hbm %s5, %s277
          %s279 = sshll.u32 %s273, 4
          %s280 = int_to_ptr.vmem [resolvable:$true] %s279
          %285 = dma.hbm_to_vmem [thread:$0]  %s278, 512, %s280, %s270, 384, 128, 8
        $region40: #{decoder_fc_forward.1} parent=35 // pred_fallthru
          _
        // Predicated region
        $region41: #{decoder_fc_forward.1} parent=35 // pred_check
          %p286 = pneg %p172
        $region42: #{decoder_fc_forward.1} parent=35 // pred_check_branch
          %288 = sbr.rel (%p286) target = $region44
        $region43: #{decoder_fc_forward.1} parent=35 // pred_region
          %p289 = scmp.lt.s32.totalorder %s21, 2
          %s290 = scalar_select %p289, %s21, 2
          %s291 = scalar_lea.vmem %s6, %s290
        $region44: #{decoder_fc_forward.1} parent=35 // pred_fallthru
          _
      $region36: #{decoder_fc_forward.1} parent=5 // pred_fallthru
        _
      %p292 = scmp.le.s32.totalorder 1, %s21
      %p293 = scmp.lt.s32.totalorder %s21, 4
      %p294 = pnand %p292, %p293
      %p295 = pneg %p294
      // Predicated region
      $region45: #{decoder_fc_forward.1} parent=5 // pred_check
        _
      $region46: #{decoder_fc_forward.1} parent=5 // pred_check_branch
        %297 = sbr.rel (%p294) target = $region48
      $region47: #{decoder_fc_forward.1} parent=5 // pred_region
        %s298 = ssub.s32 %s21, 1
        // Predicated region
        $region49: #{decoder_fc_forward.1} parent=47 // pred_check
          %p299 = pneg %p42
        $region50: #{decoder_fc_forward.1} parent=47 // pred_check_branch
          %301 = sbr.rel (%p299) target = $region52
        $region51: #{decoder_fc_forward.1} parent=47 // pred_region
          %302 = dma.done [#allocation3], 32
        $region52: #{decoder_fc_forward.1} parent=47 // pred_fallthru
          _
        // Predicated region
        $region53: #{decoder_fc_forward.1} parent=47 // pred_check
          %p303 = pneg %p63
        $region54: #{decoder_fc_forward.1} parent=47 // pred_check_branch
          %305 = sbr.rel (%p303) target = $region56
        $region55: #{decoder_fc_forward.1} parent=47 // pred_region
          %306 = dma.done [#allocation6], 512
        $region56: #{decoder_fc_forward.1} parent=47 // pred_fallthru
          _
        // Predicated region
        $region57: #{decoder_fc_forward.1} parent=47 // pred_check
          %p307 = pneg %p105
        $region58: #{decoder_fc_forward.1} parent=47 // pred_check_branch
          %309 = sbr.rel (%p307) target = $region60
        $region59: #{decoder_fc_forward.1} parent=47 // pred_region
          %310 = dma.done [#allocation6], 512
        $region60: #{decoder_fc_forward.1} parent=47 // pred_fallthru
          _
        %s311 = sand.u32 %s139, 1
        %s312 = scalar_lea.sflag [#allocation9], %s311
        %s313 = sand.u32 %s139, 1
        %s314 = smul.addr %s313, 32
        %s315 = scalar_lea.vmem [#allocation8], %s314
        // Predicated region
        $region61: #{decoder_fc_forward.1} parent=47 // pred_check
          %p316 = pneg %p152
        $region62: #{decoder_fc_forward.1} parent=47 // pred_check_branch
          %318 = sbr.rel (%p316) target = $region64
        $region63: #{decoder_fc_forward.1} parent=47 // pred_region
          %319 = dma.done %s312, 512
        $region64: #{decoder_fc_forward.1} parent=47 // pred_fallthru
          _
        %p320 = pneg %p42
        %p321 = pneg %p39
        %p322 = pneg %p63
        %p323 = pneg %p60
        %p324 = pneg %p84
        %p325 = pneg %p81
        %p326 = pneg %p105
        %p327 = pneg %p102
        %p328 = pneg %p126
        %p329 = pneg %p123
        %s330 = sand.u32 %s139, 1
        %s331 = scalar_lea.sflag [#allocation9], %s330
        %s332 = sand.u32 %s139, 1
        %s333 = smul.addr %s332, 32
        %s334 = scalar_lea.vmem [#allocation8], %s333
        %p335 = pneg %p152
        %p336 = pneg %p149
        %p337 = scmp.lt.s32.totalorder %s26, 2
        %s338 = scalar_select %p337, %s26, 2
        %s339 = scalar_lea.vmem %s6, %s338
        %p340 = pneg %p178
        %p341 = pneg %p175
        %p342 = pneg %p204
        %p343 = pneg %p201
        %s344 = sand.u32 %s191, 1
        %s345 = scalar_lea.sflag [#allocation4], %s344
        %s346 = sand.u32 %s191, 1
        %s347 = smul.addr %s346, 2
        %s348 = scalar_lea.vmem [#allocation10], %s347
        %p349 = scmp.lt.s32.totalorder %s26, 2
        %s350 = scalar_select %p349, %s26, 2
        %s351 = scalar_lea.vmem %s6, %s350
        %v352 = vld [vmem:[#allocation2] sm:$0x3]
        %v353 = vld [vmem:[#allocation5] sm:$0xff]
        %v354 = vld [vmem:[#allocation5 + $0x8] sm:$0xff]
        %v355 = vld [vmem:[#allocation5 + $0x10] sm:$0xff]
        %v356 = vld [vmem:[#allocation5 + $0x18] sm:$0xff]
        %v357 = vld [vmem:[%s2] sm:$0x1]
        %v359 = vlaneseq
        %v360 = vshrl.u32 %v359, 7
        %v361 = vsub.s32 0, %v360
        %v362 = vrot.slane %v357, %v361
        %vm364 = vcmask 261120
        %v366 = vsel %vm364, %v352, 0
        %368 = vmatprep.subr.mxu0 0.0
        %369 = vmatpush1.msra.mxu0 0.0
        %370 = vmatprep.subr.mxu0 0.0
        %371 = vmatpush1.msra.mxu0 0.0
        %372 = vmatprep.subr.mxu0 0.0
        %373 = vmatpush1.msra.mxu0 0.0
        %374 = vmatprep.subr.mxu0 0.0
        %375 = vmatpush1.msra.mxu0 0.0
        %376 = vmatprep.subr.mxu0 0.0
        %377 = vmatpush1.msra.mxu0 0.0
        %378 = vmatprep.subr.mxu0 0.0
        %379 = vmatpush1.msra.mxu0 0.0
        %380 = vmatprep.subr.mxu0 0.0
        %381 = vmatpush1.msra.mxu0 0.0
        %382 = vmatprep.subr.mxu0 0.0
        %383 = vmatpush1.msra.mxu0 0.0
        %384 = vmatprep.subr.mxu0 0.0
        %385 = vmatpush1.msra.mxu0 0.0
        %386 = vmatprep.subr.mxu0 0.0
        %387 = vmatpush1.msra.mxu0 0.0
        %388 = vmatprep.subr.mxu0 0.0
        %389 = vmatpush1.msra.mxu0 0.0
        %390 = vmatprep.subr.mxu0 0.0
        %391 = vmatpush1.msra.mxu0 0.0
        %392 = vmatprep.subr.mxu0 0.0
        %393 = vmatpush1.msra.mxu0 %v356
        %394 = vmatprep.subr.mxu0 0.0
        %395 = vmatpush1.msra.mxu0 %v355
        %396 = vmatprep.subr.mxu0 0.0
        %397 = vmatpush1.msra.mxu0 %v354
        %398 = vmatprep.subr.mxu0 0.0
        %399 = vmatpush1.msra.mxu0 %v353
        %400 = vmatprep.subr.mxu0 0.0
        %401 = vmatpush2.msra.mxu0 0.0
        %402 = vmatprep.subr.mxu0 0.0
        %403 = vmatpush2.msra.mxu0 0.0
        %404 = vmatprep.subr.mxu0 0.0
        %405 = vmatpush2.msra.mxu0 0.0
        %406 = vmatprep.subr.mxu0 0.0
        %407 = vmatpush2.msra.mxu0 0.0
        %408 = vmatprep.subr.mxu0 0.0
        %409 = vmatpush2.msra.mxu0 0.0
        %410 = vmatprep.subr.mxu0 0.0
        %411 = vmatpush2.msra.mxu0 0.0
        %412 = vmatprep.subr.mxu0 0.0
        %413 = vmatpush2.msra.mxu0 0.0
        %414 = vmatprep.subr.mxu0 0.0
        %415 = vmatpush2.msra.mxu0 0.0
        %416 = vmatprep.subr.mxu0 0.0
        %417 = vmatpush2.msra.mxu0 0.0
        %418 = vmatprep.subr.mxu0 0.0
        %419 = vmatpush2.msra.mxu0 0.0
        %420 = vmatprep.subr.mxu0 0.0
        %421 = vmatpush2.msra.mxu0 0.0
        %422 = vmatprep.subr.mxu0 0.0
        %423 = vmatpush2.msra.mxu0 0.0
        %424 = vmatprep.subr.mxu0 0.0
        %425 = vmatpush2.msra.mxu0 0.0
        %426 = vmatprep.subr.mxu0 0.0
        %427 = vmatpush2.msra.mxu0 0.0
        %428 = vmatprep.subr.mxu0 0.0
        %429 = vmatpush2.msra.mxu0 0.0
        %430 = vmatprep.subr.mxu0 0.0
        %431 = vmatpush2.msra.mxu0 0.0
        %432 = vmatprep.mubr.f32.mxu0 0.0
        %433 = vmatmul.mubr.f32.gmra.mxu0 %v366
        %v434 = vpop.f32.mrf.mxu0
        %v435 = vadd.f32 %v362, %v434
        %v436 = vpop.f32.mrf.mxu0
        %437 = vdwg.mxu0
        %vm438 = vcmp.ge.f32.partialorder %v435, 0.0
        %v439 = vmul.f32 %v435, 0.01
        %v440 = vsel %vm438, %v435, %v439
        %v441 = vld [vmem:[#allocation7] sm:$0xff]
        %v442 = vld [vmem:[#allocation7 + $0x8] sm:$0xff]
        %v443 = vld [vmem:[#allocation7 + $0x10] sm:$0xff]
        %v444 = vld [vmem:[#allocation7 + $0x18] sm:$0xff]
        %v445 = vld [vmem:[%s4] sm:$0x1]
        %v447 = vlaneseq
        %v448 = vshrl.u32 %v447, 7
        %v449 = vsub.s32 0, %v448
        %v450 = vrot.slane %v445, %v449
        %v453 = vsel %vm364, %v440, 0
        %455 = vmatprep.subr.mxu0 0.0
        %456 = vmatpush1.msra.mxu0 0.0
        %457 = vmatprep.subr.mxu0 0.0
        %458 = vmatpush1.msra.mxu0 0.0
        %459 = vmatprep.subr.mxu0 0.0
        %460 = vmatpush1.msra.mxu0 0.0
        %461 = vmatprep.subr.mxu0 0.0
        %462 = vmatpush1.msra.mxu0 0.0
        %463 = vmatprep.subr.mxu0 0.0
        %464 = vmatpush1.msra.mxu0 0.0
        %465 = vmatprep.subr.mxu0 0.0
        %466 = vmatpush1.msra.mxu0 0.0
        %467 = vmatprep.subr.mxu0 0.0
        %468 = vmatpush1.msra.mxu0 0.0
        %469 = vmatprep.subr.mxu0 0.0
        %470 = vmatpush1.msra.mxu0 0.0
        %471 = vmatprep.subr.mxu0 0.0
        %472 = vmatpush1.msra.mxu0 0.0
        %473 = vmatprep.subr.mxu0 0.0
        %474 = vmatpush1.msra.mxu0 0.0
        %475 = vmatprep.subr.mxu0 0.0
        %476 = vmatpush1.msra.mxu0 0.0
        %477 = vmatprep.subr.mxu0 0.0
        %478 = vmatpush1.msra.mxu0 0.0
        %479 = vmatprep.subr.mxu0 0.0
        %480 = vmatpush1.msra.mxu0 %v444
        %481 = vmatprep.subr.mxu0 0.0
        %482 = vmatpush1.msra.mxu0 %v443
        %483 = vmatprep.subr.mxu0 0.0
        %484 = vmatpush1.msra.mxu0 %v442
        %485 = vmatprep.subr.mxu0 0.0
        %486 = vmatpush1.msra.mxu0 %v441
        %487 = vmatprep.subr.mxu0 0.0
        %488 = vmatpush2.msra.mxu0 0.0
        %489 = vmatprep.subr.mxu0 0.0
        %490 = vmatpush2.msra.mxu0 0.0
        %491 = vmatprep.subr.mxu0 0.0
        %492 = vmatpush2.msra.mxu0 0.0
        %493 = vmatprep.subr.mxu0 0.0
        %494 = vmatpush2.msra.mxu0 0.0
        %495 = vmatprep.subr.mxu0 0.0
        %496 = vmatpush2.msra.mxu0 0.0
        %497 = vmatprep.subr.mxu0 0.0
        %498 = vmatpush2.msra.mxu0 0.0
        %499 = vmatprep.subr.mxu0 0.0
        %500 = vmatpush2.msra.mxu0 0.0
        %501 = vmatprep.subr.mxu0 0.0
        %502 = vmatpush2.msra.mxu0 0.0
        %503 = vmatprep.subr.mxu0 0.0
        %504 = vmatpush2.msra.mxu0 0.0
        %505 = vmatprep.subr.mxu0 0.0
        %506 = vmatpush2.msra.mxu0 0.0
        %507 = vmatprep.subr.mxu0 0.0
        %508 = vmatpush2.msra.mxu0 0.0
        %509 = vmatprep.subr.mxu0 0.0
        %510 = vmatpush2.msra.mxu0 0.0
        %511 = vmatprep.subr.mxu0 0.0
        %512 = vmatpush2.msra.mxu0 0.0
        %513 = vmatprep.subr.mxu0 0.0
        %514 = vmatpush2.msra.mxu0 0.0
        %515 = vmatprep.subr.mxu0 0.0
        %516 = vmatpush2.msra.mxu0 0.0
        %517 = vmatprep.subr.mxu0 0.0
        %518 = vmatpush2.msra.mxu0 0.0
        %519 = vmatprep.mubr.f32.mxu0 0.0
        %520 = vmatmul.mubr.f32.gmra.mxu0 %v453
        %v521 = vpop.f32.mrf.mxu0
        %v522 = vadd.f32 %v450, %v521
        %v523 = vpop.f32.mrf.mxu0
        %524 = vdwg.mxu0
        %vm525 = vcmp.ge.f32.partialorder %v522, 0.0
        %v526 = vmul.f32 %v522, 0.01
        %v527 = vsel %vm525, %v522, %v526
        %v528 = vld [vmem:[%s315] sm:$0xff]
        %v529 = vld [vmem:[%s315 + $0x8] sm:$0xff]
        %v530 = vld [vmem:[%s315 + $0x10] sm:$0xff]
        %v531 = vld [vmem:[%s315 + $0x18] sm:$0xff]
        %v532 = vld [vmem:[%s351] sm:$0x1]
        %v534 = vlaneseq
        %v535 = vshrl.u32 %v534, 7
        %v536 = vsub.s32 0, %v535
        %v537 = vrot.slane %v532, %v536
        %v540 = vsel %vm364, %v527, 0
        %542 = vmatprep.subr.mxu0 0.0
        %543 = vmatpush1.msra.mxu0 0.0
        %544 = vmatprep.subr.mxu0 0.0
        %545 = vmatpush1.msra.mxu0 0.0
        %546 = vmatprep.subr.mxu0 0.0
        %547 = vmatpush1.msra.mxu0 0.0
        %548 = vmatprep.subr.mxu0 0.0
        %549 = vmatpush1.msra.mxu0 0.0
        %550 = vmatprep.subr.mxu0 0.0
        %551 = vmatpush1.msra.mxu0 0.0
        %552 = vmatprep.subr.mxu0 0.0
        %553 = vmatpush1.msra.mxu0 0.0
        %554 = vmatprep.subr.mxu0 0.0
        %555 = vmatpush1.msra.mxu0 0.0
        %556 = vmatprep.subr.mxu0 0.0
        %557 = vmatpush1.msra.mxu0 0.0
        %558 = vmatprep.subr.mxu0 0.0
        %559 = vmatpush1.msra.mxu0 0.0
        %560 = vmatprep.subr.mxu0 0.0
        %561 = vmatpush1.msra.mxu0 0.0
        %562 = vmatprep.subr.mxu0 0.0
        %563 = vmatpush1.msra.mxu0 0.0
        %564 = vmatprep.subr.mxu0 0.0
        %565 = vmatpush1.msra.mxu0 0.0
        %566 = vmatprep.subr.mxu0 0.0
        %567 = vmatpush1.msra.mxu0 %v531
        %568 = vmatprep.subr.mxu0 0.0
        %569 = vmatpush1.msra.mxu0 %v530
        %570 = vmatprep.subr.mxu0 0.0
        %571 = vmatpush1.msra.mxu0 %v529
        %572 = vmatprep.subr.mxu0 0.0
        %573 = vmatpush1.msra.mxu0 %v528
        %574 = vmatprep.subr.mxu0 0.0
        %575 = vmatpush2.msra.mxu0 0.0
        %576 = vmatprep.subr.mxu0 0.0
        %577 = vmatpush2.msra.mxu0 0.0
        %578 = vmatprep.subr.mxu0 0.0
        %579 = vmatpush2.msra.mxu0 0.0
        %580 = vmatprep.subr.mxu0 0.0
        %581 = vmatpush2.msra.mxu0 0.0
        %582 = vmatprep.subr.mxu0 0.0
        %583 = vmatpush2.msra.mxu0 0.0
        %584 = vmatprep.subr.mxu0 0.0
        %585 = vmatpush2.msra.mxu0 0.0
        %586 = vmatprep.subr.mxu0 0.0
        %587 = vmatpush2.msra.mxu0 0.0
        %588 = vmatprep.subr.mxu0 0.0
        %589 = vmatpush2.msra.mxu0 0.0
        %590 = vmatprep.subr.mxu0 0.0
        %591 = vmatpush2.msra.mxu0 0.0
        %592 = vmatprep.subr.mxu0 0.0
        %593 = vmatpush2.msra.mxu0 0.0
        %594 = vmatprep.subr.mxu0 0.0
        %595 = vmatpush2.msra.mxu0 0.0
        %596 = vmatprep.subr.mxu0 0.0
        %597 = vmatpush2.msra.mxu0 0.0
        %598 = vmatprep.subr.mxu0 0.0
        %599 = vmatpush2.msra.mxu0 0.0
        %600 = vmatprep.subr.mxu0 0.0
        %601 = vmatpush2.msra.mxu0 0.0
        %602 = vmatprep.subr.mxu0 0.0
        %603 = vmatpush2.msra.mxu0 0.0
        %604 = vmatprep.subr.mxu0 0.0
        %605 = vmatpush2.msra.mxu0 0.0
        %606 = vmatprep.mubr.f32.mxu0 0.0
        %607 = vmatmul.mubr.f32.gmra.mxu0 %v540
        %v608 = vpop.f32.mrf.mxu0
        %v609 = vadd.f32 %v537, %v608
        %v610 = vpop.f32.mrf.mxu0
        %611 = vdwg.mxu0
        %v612 = vxor.u32 %v609, 2147483648
        %v613 = vmul.f32 %v612, 1.442695
        %v614 = vpow.pop %v613
        %v615 = vadd.f32 %v614, 1.0
        %v616 = vrcp.pop %v615
        %v617 = vmul.f32 1.0, %v616
        %618 = vst [vmem:[%s348] sm:$0x3] %v617
        %s619 = sand.u32 %s191, 1
        %s620 = scalar_lea.sflag [#allocation4], %s619
        %s621 = sand.u32 %s191, 1
        %s622 = smul.addr %s621, 2
        %s623 = scalar_lea.vmem [#allocation10], %s622
        // Predicated region
        $region65: #{decoder_fc_forward.1} parent=47 // pred_check
          %p624 = pneg %p201
        $region66: #{decoder_fc_forward.1} parent=47 // pred_check_branch
          %626 = sbr.rel (%p624) target = $region68
        $region67: #{decoder_fc_forward.1} parent=47 // pred_region
          %s628 = ssub.s32 32, 32
          %629 = vsyncadd %s620, %s628
          %s630 = smul.addr %s26, 32
          %s631 = scalar_lea.hbm %s7, %s630
          %s633 = sshll.u32 %s623, 4
          %s634 = int_to_ptr.vmem [resolvable:$true] %s633
          %636 = dma.vmem_to_hbm [thread:$0]  %s634, 32, %s631, %s620
        $region68: #{decoder_fc_forward.1} parent=47 // pred_fallthru
          _
      $region48: #{decoder_fc_forward.1} parent=5 // pred_fallthru
        _
      %p637 = scmp.le.s32.totalorder 2, %s21
      // Predicated region
      $region69: #{decoder_fc_forward.1} parent=5 // pred_check
        %p638 = pneg %p637
      $region70: #{decoder_fc_forward.1} parent=5 // pred_check_branch
        %640 = sbr.rel (%p638) target = $region72
      $region71: #{decoder_fc_forward.1} parent=5 // pred_region
        %s641 = ssub.s32 %s21, 2
        // Predicated region
        $region73: #{decoder_fc_forward.1} parent=71 // pred_check
          %p642 = pneg %p207
        $region74: #{decoder_fc_forward.1} parent=71 // pred_check_branch
          %644 = sbr.rel (%p642) target = $region76
        $region75: #{decoder_fc_forward.1} parent=71 // pred_region
          %s645 = sand.u32 %s192, 1
          %s646 = scalar_lea.sflag [#allocation4], %s645
          %s647 = sand.u32 %s192, 1
          %s648 = smul.addr %s647, 2
          %s649 = scalar_lea.vmem [#allocation10], %s648
          %650 = dma.done %s646, 32
        $region76: #{decoder_fc_forward.1} parent=71 // pred_fallthru
          _
      $region72: #{decoder_fc_forward.1} parent=5 // pred_fallthru
        _
    $region6: #{decoder_fc_forward.1} parent=1 // loop_footer
      %s25 = sadd.s32 1, %s21
    $region7: #{decoder_fc_forward.1} parent=1 // loop_footer_branch
      %20 = sbr.rel target = $region3
    $region8: #{decoder_fc_forward.1} parent=1 // loop_exit
      _
    %651 = vsyncpa [#allocation3], 1
    %s652 = scalar_lea.sflag [#allocation3], 1
    %653 = vsyncpa %s652, 1
    %654 = vsyncpa [#allocation6], 1
    %655 = vsyncpa [#allocation9], 1
    %s656 = scalar_lea.sflag [#allocation9], 1
    %657 = vsyncpa %s656, 1
    %658 = vsyncpa [#allocation4], 1
    %s659 = scalar_lea.sflag [#allocation4], 1
    %660 = vsyncpa %s659, 1

</llo_original>
